<compile_context>
chip_gen: v7x
topology: tpu7x:2x2x1
jax: 0.10.0
libtpu: 0.0.40
codegen_flags: <defaults>
</compile_context>

<pallas_src>
import jax
import jax.numpy as jnp
from jax.experimental import pallas as pl
from jax.experimental.pallas import tpu as pltpu


LANES = 128
TARGET_BLOCK_BYTES = 4 * 1024 * 1024   # ~4 MiB per input block -> 16 MiB resident (2 in x 2 buf)
SMALL_INPUT_BYTES = 256 * 1024         # below this, launch overhead dominates -> plain XLA


def _round_up(a: int, b: int) -> int:
    return ((a + b - 1) // b) * b


def _row_align(dtype) -> int:
    # sublane alignment: 8 rows for 32-bit, 16 for 16-bit, 32 for 8-bit dtypes
    return {4: 8, 2: 16, 1: 32}.get(jnp.dtype(dtype).itemsize, 8)


def _vmem_capacity_bytes() -> int:
    try:
        return int(getattr(pltpu.get_tpu_info(), "vmem_capacity_bytes", 128 * 1024 * 1024))
    except Exception:
        return 128 * 1024 * 1024


def _num_tensorcores() -> int:
    # v7x has two TensorCores per chip; v5e/v6e have one.
    try:
        kind = jax.devices()[0].device_kind.lower().replace(" ", "")
        if "v7" in kind or "tpu7" in kind:
            return 2
    except Exception:
        pass
    return 1


def _make_mse_kernel(steps: int, block_rows: int, n_rows: int, needs_mask: bool):
    """Builds a kernel accumulating sum((x-t)^2) for one row-shard into an
    (8,128) scratch, emitted as lane-wise partials on the last reduction step."""

    def kernel(x_ref, t_ref, out_ref, acc_ref):
        s = pl.program_id(0)
        k = pl.program_id(1)

        @pl.when(k == 0)
        def _():
            acc_ref[...] = jnp.zeros_like(acc_ref)

        d = x_ref[...].astype(jnp.float32) - t_ref[...].astype(jnp.float32)
        sq = d * d

        if needs_mask:
            # Rows past n_rows (ragged last block / padded grid point) are
            # filled with unspecified data by Pallas -> zero them before use.
            row0 = (s * steps + k) * block_rows
            rows = row0 + jax.lax.broadcasted_iota(jnp.int32, (block_rows, LANES), 0)
            sq = jnp.where(rows < n_rows, sq, 0.0)

        # Fold (block_rows, 128) -> (8, 128) with pure VPU vreg adds (the
        # reshape regroups whole sublane tiles, so it is layout-free). The
        # expensive XLU cross-lane reduce is deferred to the wrapper.
        acc_ref[...] += jnp.sum(sq.reshape(-1, 8, LANES), axis=0)

        @pl.when(k == steps - 1)
        def _():
            out_ref[0] = acc_ref[...]

    return kernel


def mse_loss_pallas(x: jax.Array, target: jax.Array, *, force_pallas: bool = False,
                    target_block_bytes: int = TARGET_BLOCK_BYTES) -> jax.Array:
    """Mean-squared-error over all elements (torch.nn.MSELoss(reduction='mean'))."""
    assert x.shape == target.shape, "MSELoss requires matching shapes"
    total = int(x.size)
    if total == 0:
        return jnp.float32(0.0)

    max_item = max(jnp.dtype(x.dtype).itemsize, jnp.dtype(target.dtype).itemsize)

    # Small-input fallback: the pallas_call launch + trailing reduce dominate;
    # a fused XLA elementwise+reduce is strictly faster there.
    if not force_pallas and total * max_item < SMALL_INPUT_BYTES:
        d = x.astype(jnp.float32) - target.astype(jnp.float32)
        return jnp.mean(d * d)

    n_rows = pl.cdiv(total, LANES)
    padded_total = n_rows * LANES

    def to_slab(a):
        flat = a.reshape(-1)
        if padded_total != total:
            # Only when total is not a 128-multiple (rare for real NCHW
            # activations). Zero pad on BOTH operands -> contributes 0.
            flat = jnp.pad(flat, (0, padded_total - total))
        return flat.reshape(n_rows, LANES)

    x2, t2 = to_slab(x), to_slab(target)

    # Block sizing: target constant bytes (not rows), aligned to the sublane
    # packing of the widest dtype, never larger than the data itself.
    row_align = max(_row_align(x.dtype), _row_align(target.dtype))
    block_rows = (target_block_bytes // (LANES * max_item)) // row_align * row_align
    block_rows = max(row_align, block_rows)
    block_rows = min(block_rows, _round_up(n_rows, row_align))

    blocks_total = pl.cdiv(n_rows, block_rows)
    num_shards = min(_num_tensorcores(), blocks_total)
    steps = pl.cdiv(blocks_total, num_shards)
    # Masking needed iff the last block is ragged or the grid has padded points.
    needs_mask = (blocks_total * block_rows != n_rows) or (num_shards * steps != blocks_total)

    last_block = blocks_total - 1

    def in_map(s, k):
        # Clamp so padded grid points never DMA out of bounds; their
        # contribution is zeroed by the in-kernel row mask.
        return (jnp.minimum(s * steps + k, last_block), 0)

    block_bytes = block_rows * LANES * max_item
    cap = _vmem_capacity_bytes()
    # 128-MiB-VMEM chips (v5e/v6e): 40 MiB scoped; 64-MiB chips (v7x): 32 MiB.
    vmem_limit = 40 * 1024 * 1024 if cap >= 96 * 1024 * 1024 else 32 * 1024 * 1024
    vmem_limit = int(max(vmem_limit, 4 * block_bytes + 8 * 1024 * 1024))

    if num_shards > 1:
        # One shard per TensorCore on v7x.
        # TODO(synk): if a future Mosaic rejects CORE_PARALLEL here, fall back
        # to pltpu.PARALLEL on this axis.
        dims = (pltpu.CORE_PARALLEL, pltpu.ARBITRARY)
    else:
        dims = (pltpu.ARBITRARY, pltpu.ARBITRARY)

    kernel = _make_mse_kernel(steps, block_rows, n_rows, needs_mask)

    partials = pl.pallas_call(
        kernel,
        grid=(num_shards, steps),
        in_specs=[
            pl.BlockSpec((block_rows, LANES), in_map),
            pl.BlockSpec((block_rows, LANES), in_map),
        ],
        out_specs=pl.BlockSpec((1, 8, LANES), lambda s, k: (s, 0, 0)),
        out_shape=jax.ShapeDtypeStruct((num_shards, 8, LANES), jnp.float32),
        scratch_shapes=[pltpu.VMEM((8, LANES), jnp.float32)],
        compiler_params=pltpu.CompilerParams(
            dimension_semantics=dims,
            vmem_limit_bytes=vmem_limit,
        ),
        cost_estimate=pl.CostEstimate(
            flops=3 * padded_total,
            transcendentals=0,
            bytes_accessed=(x2.size * x2.dtype.itemsize
                            + t2.size * t2.dtype.itemsize
                            + num_shards * 8 * LANES * 4),
        ),
    )(x2, t2)

    # Final tiny cross-lane reduce (num_shards*8*128 floats) + mean outside.
    return jnp.sum(partials) / jnp.float32(total)


class ContentLoss:
    """JAX/Pallas port of the PyTorch ContentLoss module.

    __init__ stores a detached target; __call__ computes MSE(input, target),
    stashes it in self.loss, and returns the input unchanged.

    Note: self.loss is a Python side effect; under jax.jit the stored value is
    a tracer — read it outside jit or return it explicitly in jitted code.
    """

    def __init__(self, target: jax.Array):
        self.target = jax.lax.stop_gradient(target)
        self.loss = jnp.float32(0.0)

    def __call__(self, x: jax.Array) -> jax.Array:
        self.loss = mse_loss_pallas(x, self.target)
        return x  # identity passthrough, exactly like the PyTorch module


if __name__ == "__main__":
    key = jax.random.PRNGKey(0)
    k_in, k_tgt, k_in2, k_tgt2, k_in3, k_tgt3 = jax.random.split(key, 6)

    # NCHW, small shapes: batch=2, channels=4, spatial=16x16
    x = jax.random.normal(k_in, (2, 4, 16, 16), dtype=jnp.float32)
    target = jax.random.normal(k_tgt, (2, 4, 16, 16), dtype=jnp.float32)

    module = ContentLoss(target)
    out = jax.block_until_ready(module(x))
    loss_default = jax.block_until_ready(module.loss)   # small-input XLA path

    # Force the Pallas path at this small size to actually exercise the kernel.
    loss_pallas = jax.block_until_ready(mse_loss_pallas(x, target, force_pallas=True))

    ref = jnp.mean((x - target) ** 2)
    assert jnp.allclose(loss_pallas, ref, rtol=1e-5, atol=1e-6), (loss_pallas, ref)
    assert jnp.allclose(loss_default, ref, rtol=1e-5, atol=1e-6), (loss_default, ref)
    assert out.shape == x.shape and jnp.array_equal(out, x)

    # Odd shape: exercises the lane-pad (total % 128 != 0) path.
    x_odd = jax.random.normal(k_in2, (2, 3, 17, 19), dtype=jnp.float32)
    t_odd = jax.random.normal(k_tgt2, (2, 3, 17, 19), dtype=jnp.float32)
    loss_odd = jax.block_until_ready(mse_loss_pallas(x_odd, t_odd, force_pallas=True))
    ref_odd = jnp.mean((x_odd - t_odd) ** 2)
    assert jnp.allclose(loss_odd, ref_odd, rtol=1e-5, atol=1e-6), (loss_odd, ref_odd)

    # Ragged-block + multi-step path: n_rows not a block multiple, tiny blocks
    # force several reduction steps (exercises acc init/accumulate/finalize and
    # the in-kernel row mask).
    x_rag = jax.random.normal(k_in3, (1, 3, 30, 30), dtype=jnp.float32)
    t_rag = jax.random.normal(k_tgt3, (1, 3, 30, 30), dtype=jnp.float32)
    loss_rag1 = jax.block_until_ready(mse_loss_pallas(x_rag, t_rag, force_pallas=True))
    loss_rag2 = jax.block_until_ready(
        mse_loss_pallas(x_rag, t_rag, force_pallas=True, target_block_bytes=4096))
    ref_rag = jnp.mean((x_rag - t_rag) ** 2)
    assert jnp.allclose(loss_rag1, ref_rag, rtol=1e-5, atol=1e-6), (loss_rag1, ref_rag)
    assert jnp.allclose(loss_rag2, ref_rag, rtol=1e-5, atol=1e-6), (loss_rag2, ref_rag)

    print("KERNEL_OK")
</pallas_src>

<mosaic_0001>
module attributes {stable_mosaic.version = 11 : i64} {
  func.func @kernel(%arg0: i32, %arg1: i32, %arg2: memref<16x128xf32, #tpu.memory_space<vmem>>, %arg3: memref<16x128xf32, #tpu.memory_space<vmem>>, %arg4: memref<1x8x128xf32, #tpu.memory_space<vmem>>, %arg5: memref<8x128xf32, #tpu.memory_space<vmem>>) attributes {dimension_semantics = [#tpu.dimension_semantics<arbitrary>, #tpu.dimension_semantics<arbitrary>], iteration_bounds = array<i64: 1, 1>, scalar_prefetch = 0 : i64, scratch_operands = 1 : i64, tpu.core_type = #tpu.core_type<tc>, window_params = [{transform_indices = @transform_0, window_bounds = array<i64: 16, 128>}, {transform_indices = @transform_1, window_bounds = array<i64: 16, 128>}, {transform_indices = @transform_2, window_bounds = array<i64: 1, 8, 128>}]} {
    %c0_i32 = arith.constant 0 : i32
    %0 = arith.cmpi eq, %arg1, %c0_i32 : i32
    %1 = arith.extui %0 : i1 to i32
    %c0_i32_0 = arith.constant 0 : i32
    %2 = arith.cmpi ne, %1, %c0_i32_0 : i32
    scf.if %2 {
      %cst_10 = arith.constant 0.000000e+00 : f32
      %15 = vector.broadcast %cst_10 : f32 to vector<8x128xf32>
      %c0_11 = arith.constant 0 : index
      %c0_12 = arith.constant 0 : index
      %16 = vector.load %arg5[%c0_11, %c0_12] : memref<8x128xf32, #tpu.memory_space<vmem>>, vector<8x128xf32>
      tpu.vector_store %arg5[%c0_11, %c0_12], %15 {strides = array<i32>} : memref<8x128xf32, #tpu.memory_space<vmem>>, vector<8x128xf32>,
    } else {
    }
    %c0 = arith.constant 0 : index
    %c0_1 = arith.constant 0 : index
    %3 = vector.load %arg2[%c0, %c0_1] : memref<16x128xf32, #tpu.memory_space<vmem>>, vector<16x128xf32>
    %c0_2 = arith.constant 0 : index
    %c0_3 = arith.constant 0 : index
    %4 = vector.load %arg3[%c0_2, %c0_3] : memref<16x128xf32, #tpu.memory_space<vmem>>, vector<16x128xf32>
    %5 = arith.subf %3, %4 : vector<16x128xf32>
    %6 = arith.mulf %5, %5 : vector<16x128xf32>
    %c0_4 = arith.constant 0 : index
    %c0_5 = arith.constant 0 : index
    %7 = vector.load %arg5[%c0_4, %c0_5] : memref<8x128xf32, #tpu.memory_space<vmem>>, vector<8x128xf32>
    %8 = vector.shape_cast %6 : vector<16x128xf32> to vector<2x8x128xf32>
    %cst = arith.constant dense<0.000000e+00> : vector<8x128xf32>
    %9 = vector.multi_reduction <add>, %8, %cst [0] : vector<2x8x128xf32> to vector<8x128xf32>
    %10 = arith.addf %7, %9 : vector<8x128xf32>
    %c0_6 = arith.constant 0 : index
    %c0_7 = arith.constant 0 : index
    %11 = vector.load %arg5[%c0_6, %c0_7] : memref<8x128xf32, #tpu.memory_space<vmem>>, vector<8x128xf32>
    tpu.vector_store %arg5[%c0_6, %c0_7], %10 {strides = array<i32>} : memref<8x128xf32, #tpu.memory_space<vmem>>, vector<8x128xf32>,
    %c0_i32_8 = arith.constant 0 : i32
    %12 = arith.cmpi eq, %arg1, %c0_i32_8 : i32
    %13 = arith.extui %12 : i1 to i32
    %c0_i32_9 = arith.constant 0 : i32
    %14 = arith.cmpi ne, %13, %c0_i32_9 : i32
    scf.if %14 {
      %c0_10 = arith.constant 0 : index
      %c0_11 = arith.constant 0 : index
      %15 = vector.load %arg5[%c0_10, %c0_11] : memref<8x128xf32, #tpu.memory_space<vmem>>, vector<8x128xf32>
      %c0_12 = arith.constant 0 : index
      %c0_13 = arith.constant 0 : index
      %c0_14 = arith.constant 0 : index
      %16 = vector.load %arg4[%c0_12, %c0_13, %c0_14] : memref<1x8x128xf32, #tpu.memory_space<vmem>>, vector<1x8x128xf32>
      %17 = vector.shape_cast %16 : vector<1x8x128xf32> to vector<8x128xf32>
      %18 = vector.shape_cast %15 : vector<8x128xf32> to vector<1x8x128xf32>
      tpu.vector_store %arg4[%c0_12, %c0_13, %c0_14], %18 {strides = array<i32>} : memref<1x8x128xf32, #tpu.memory_space<vmem>>, vector<1x8x128xf32>,
    } else {
    }
    return
  }
  func.func @transform_0(%arg0: i32, %arg1: i32) -> (i32, i32) {
    %c1_i32 = arith.constant 1 : i32
    %0 = arith.muli %arg0, %c1_i32 : i32
    %1 = arith.addi %0, %arg1 : i32
    %c0_i32 = arith.constant 0 : i32
    %2 = arith.minsi %1, %c0_i32 : i32
    %c0_i32_0 = arith.constant 0 : i32
    %c0_i32_1 = arith.constant 0 : i32
    return %2, %c0_i32_0 : i32, i32
  }
  func.func @transform_1(%arg0: i32, %arg1: i32) -> (i32, i32) {
    %c1_i32 = arith.constant 1 : i32
    %0 = arith.muli %arg0, %c1_i32 : i32
    %1 = arith.addi %0, %arg1 : i32
    %c0_i32 = arith.constant 0 : i32
    %2 = arith.minsi %1, %c0_i32 : i32
    %c0_i32_0 = arith.constant 0 : i32
    %c0_i32_1 = arith.constant 0 : i32
    return %2, %c0_i32_0 : i32, i32
  }
  func.func @transform_2(%arg0: i32, %arg1: i32) -> (i32, i32, i32) {
    %c0_i32 = arith.constant 0 : i32
    %c0_i32_0 = arith.constant 0 : i32
    %c0_i32_1 = arith.constant 0 : i32
    return %arg0, %c0_i32, %c0_i32_0 : i32, i32, i32
  }
}

</mosaic_0001>

<llo_original>
// kernel: tpu_custom_call.1
$region0: #{tpu_custom_call.1}
  #allocation0 [shape = 'u32[]', space=smem, size = 0x4, offset = 0x4, fixed_abs, tag = 'smem constant byte address 0x4 - core index']
  #allocation1 [shape = 'u32[144,128]{1,0:T(1,128)}', space=vmem, size = 0x12000, scoped, tag = 'internal scratch']
  #allocation2 [shape = 'f32[8,128]{1,0:T(8,128)}', space=vmem, size = 0x1000, scoped, tag = 'scratch operand']
  %s0 = inlined_call_operand.hbm [shape: f32[16,128], index: 0, kind: input, shape index: {}]
  %s1 = inlined_call_operand.hbm [shape: f32[16,128], index: 1, kind: input, shape index: {}]
  %s2 = inlined_call_operand.hbm [shape: f32[1,8,128], index: 2, kind: output, shape index: {}]
  %s3 = sld [smem:[#allocation0]]
  $region34: #{tpu_custom_call.1} parent=0
    _
  %s5 = ssub.s32 1, %s3
  %s6 = scalar_select 0, %s5, %s3
  $region1: #{tpu_custom_call.1} parent=0
    #allocation3 [shape = 'u8[8192]{0}', space=vmem, size = 0x2000, scoped, tag = 'input window, operand 0, single buffered']
    #allocation4 [shape = 's32[1]{0}', space=sflag, size = 0x4, scoped, tag = 'scoped memory for tpu_custom_call.1']
    #allocation5 [shape = 's32[1]{0}', space=sflag, size = 0x4, scoped, tag = 'scoped memory for tpu_custom_call.1']
    #allocation6 [shape = 'u8[8192]{0}', space=vmem, size = 0x2000, scoped, tag = 'input window, operand 1, single buffered']
    #allocation7 [shape = 's32[1]{0}', space=sflag, size = 0x4, scoped, tag = 'scoped memory for tpu_custom_call.1']
    #allocation8 [shape = 'u8[4096]{0}', space=vmem, size = 0x1000, scoped, tag = 'output window, operand 0, single buffered']
    %7 = vsyncpa [#allocation4], 0
    %8 = vsyncpa [#allocation7], 0
    %9 = vsyncpa [#allocation5], 0
    // Predicated region
    $region2: #{tpu_custom_call.1} parent=1 // pred_check
      _
    $region3: #{tpu_custom_call.1} parent=1 // pred_check_branch
      %11 = sbr.rel (0) target = $region5
    $region4: #{tpu_custom_call.1} parent=1 // pred_region
      %s12 = sadd.s32 0, 0
      %p13 = scmp.lt.s32.totalorder %s12, 0
      %s14 = scalar_select %p13, %s12, 0
      %s15 = smul.u32 2, %s14
      %s17 = ssub.s32 256, 256
      %18 = vsyncadd [#allocation4], %s17
      %s19 = smul.addr %s15, 128
      %s20 = scalar_lea.hbm %s0, %s19
      %s21 = sshll.u32 [#allocation3], 4
      %s22 = int_to_ptr.vmem [resolvable:$true] %s21
      %27 = dma.hbm_to_vmem [thread:$0]  %s20, 256, %s22, [#allocation4], 128, 128, 8
    $region5: #{tpu_custom_call.1} parent=1 // pred_fallthru
      _
    // Predicated region
    $region6: #{tpu_custom_call.1} parent=1 // pred_check
      _
    $region7: #{tpu_custom_call.1} parent=1 // pred_check_branch
      %29 = sbr.rel (0) target = $region9
    $region8: #{tpu_custom_call.1} parent=1 // pred_region
      %s30 = sadd.s32 0, 0
      %p31 = scmp.lt.s32.totalorder %s30, 0
      %s32 = scalar_select %p31, %s30, 0
      %s33 = smul.u32 2, %s32
      %s35 = ssub.s32 256, 256
      %36 = vsyncadd [#allocation7], %s35
      %s37 = smul.addr %s33, 128
      %s38 = scalar_lea.hbm %s1, %s37
      %s39 = sshll.u32 [#allocation6], 4
      %s40 = int_to_ptr.vmem [resolvable:$true] %s39
      %45 = dma.hbm_to_vmem [thread:$0]  %s38, 256, %s40, [#allocation7], 128, 128, 8
    $region9: #{tpu_custom_call.1} parent=1 // pred_fallthru
      _
    // Predicated region
    $region10: #{tpu_custom_call.1} parent=1 // pred_check
      _
    $region11: #{tpu_custom_call.1} parent=1 // pred_check_branch
      %47 = sbr.rel (0) target = $region13
    $region12: #{tpu_custom_call.1} parent=1 // pred_region
      %48 = dma.done [#allocation4], 256
    $region13: #{tpu_custom_call.1} parent=1 // pred_fallthru
      _
    // Predicated region
    $region14: #{tpu_custom_call.1} parent=1 // pred_check
      _
    $region15: #{tpu_custom_call.1} parent=1 // pred_check_branch
      %50 = sbr.rel (0) target = $region17
    $region16: #{tpu_custom_call.1} parent=1 // pred_region
      %51 = dma.done [#allocation7], 256
    $region17: #{tpu_custom_call.1} parent=1 // pred_fallthru
      _
    %s52 = sadd.s32 0, 0
    %p53 = scmp.lt.s32.totalorder %s52, 0
    %s54 = scalar_select %p53, %s52, 0
    %s55 = smul.u32 2, %s54
    %s56 = sadd.s32 0, 0
    %p57 = scmp.lt.s32.totalorder %s56, 0
    %s58 = scalar_select %p57, %s56, 0
    %s59 = smul.u32 2, %s58
    %p60 = scmp.eq.s32.totalorder 0, 0
    // Predicated region
    $region18: #{tpu_custom_call.1} parent=1 // pred_check
      %p61 = pneg %p60
    $region19: #{tpu_custom_call.1} parent=1 // pred_check_branch
      %63 = sbr.rel (%p61) target = $region21
    $region20: #{tpu_custom_call.1} parent=1 // pred_region
      %64 = vst [vmem:[#allocation2] sm:$0xff] 0.0
    $region21: #{tpu_custom_call.1} parent=1 // pred_fallthru
      _
    %v65 = vld [vmem:[#allocation3] sm:$0xff]
    %v66 = vld [vmem:[#allocation3 + $0x8] sm:$0xff]
    %v67 = vld [vmem:[#allocation6] sm:$0xff]
    %v68 = vld [vmem:[#allocation6 + $0x8] sm:$0xff]
    %v69 = vsub.f32 %v65, %v67
    %v70 = vsub.f32 %v66, %v68
    %v71 = vmul.f32 %v69, %v69
    %v72 = vmul.f32 %v70, %v70
    %v73 = vld [vmem:[#allocation2] sm:$0xff]
    %v74 = vadd.f32 %v71, %v72
    %v75 = vadd.f32 %v73, %v74
    %76 = vst [vmem:[#allocation2] sm:$0xff] %v75
    // Predicated region
    $region22: #{tpu_custom_call.1} parent=1 // pred_check
      %p77 = pneg %p60
    $region23: #{tpu_custom_call.1} parent=1 // pred_check_branch
      %79 = sbr.rel (%p77) target = $region25
    $region24: #{tpu_custom_call.1} parent=1 // pred_region
      %v80 = vld [vmem:[#allocation2] sm:$0xff]
      %81 = vst [vmem:[#allocation8] sm:$0xff] %v80
    $region25: #{tpu_custom_call.1} parent=1 // pred_fallthru
      _
    // Predicated region
    $region26: #{tpu_custom_call.1} parent=1 // pred_check
      _
    $region27: #{tpu_custom_call.1} parent=1 // pred_check_branch
      %83 = sbr.rel (0) target = $region29
    $region28: #{tpu_custom_call.1} parent=1 // pred_region
      %s85 = ssub.s32 128, 128
      %86 = vsyncadd [#allocation5], %s85
      %s88 = sshll.u32 [#allocation8], 4
      %s89 = int_to_ptr.vmem [resolvable:$true] %s88
      %91 = dma.vmem_to_hbm [thread:$0]  %s89, 128, %s2, [#allocation5]
    $region29: #{tpu_custom_call.1} parent=1 // pred_fallthru
      _
    // Predicated region
    $region30: #{tpu_custom_call.1} parent=1 // pred_check
      _
    $region31: #{tpu_custom_call.1} parent=1 // pred_check_branch
      %93 = sbr.rel (0) target = $region33
    $region32: #{tpu_custom_call.1} parent=1 // pred_region
      %94 = dma.done [#allocation5], 128
    $region33: #{tpu_custom_call.1} parent=1 // pred_fallthru
      _
    %95 = vsyncpa [#allocation4], 1
    %96 = vsyncpa [#allocation7], 1
    %97 = vsyncpa [#allocation5], 1

</llo_original>
